<compile_context>
chip_gen: v7x
topology: tpu7x:2x2x1
jax: 0.10.0
libtpu: 0.0.40
codegen_flags: <defaults>
</compile_context>

<pallas_src>
import jax
import jax.numpy as jnp
from jax.experimental import pallas as pl
from jax.experimental.pallas import tpu as pltpu


def _cncvae_kernel(x1_ref, x2_ref, eps_ref,
                   w_enc1_ref, w_enc2_ref, b_enc_ref, gamma_ref, beta_ref,
                   w_heads_ref, b_heads_ref,
                   w_dec1_ref, b_dec1_ref, w_dec2_ref, b_dec2_ref,
                   packed_ref):
    ls = w_dec1_ref.shape[0]          # latent size
    fd = w_dec2_ref.shape[1]          # feature_dim

    # encoder: relu(concat(x1, x2) @ W_enc + b) with the concat folded into a
    # weight split -> two dots into the same f32 accumulator.
    h = (jnp.dot(x1_ref[...], w_enc1_ref[...], preferred_element_type=jnp.float32)
         + jnp.dot(x2_ref[...], w_enc2_ref[...], preferred_element_type=jnp.float32)
         + b_enc_ref[...])
    h = jnp.maximum(h, 0.0)

    # BatchNorm1d, training mode (batch stats, biased variance), single pass:
    # var = E[h^2] - E[h]^2.
    m1 = jnp.mean(h, axis=0, keepdims=True)
    m2 = jnp.mean(h * h, axis=0, keepdims=True)
    var = m2 - m1 * m1
    h = (h - m1) * jax.lax.rsqrt(var + 1e-5) * gamma_ref[...] + beta_ref[...]

    # fused latent heads: [z_mean | z_std] = relu(h @ [W_mean | W_std] + [b|b])
    heads = jnp.maximum(
        jnp.dot(h, w_heads_ref[...], preferred_element_type=jnp.float32)
        + b_heads_ref[...], 0.0)
    z_mean = heads[:, :ls]
    z_std = heads[:, ls:]

    # reparametrize: the original module returns mean + std * eps
    # (the exp(std/2) it computes is unused) -- reproduce that exactly.
    z = z_mean + z_std * eps_ref[...]

    # decoder: relu(dec1(z)) -> relu(dec2(.))
    d1 = jnp.maximum(
        jnp.dot(z, w_dec1_ref[...], preferred_element_type=jnp.float32)
        + b_dec1_ref[...], 0.0)
    out = jnp.maximum(
        jnp.dot(d1, w_dec2_ref[...], preferred_element_type=jnp.float32)
        + b_dec2_ref[...], 0.0)

    # single lane-dense output slab: [ out | z | mean | std | zero pad ]
    packed_ref[...] = jnp.zeros_like(packed_ref)
    packed_ref[:, 0:fd] = out
    packed_ref[:, fd:fd + ls] = z
    packed_ref[:, fd + ls:fd + 2 * ls] = z_mean
    packed_ref[:, fd + 2 * ls:fd + 3 * ls] = z_std


def cncvae_forward(x1, x2, params, eps):
    """Forward pass. `eps` plays the role of torch.randn_like(s) (passed in so
    the kernel is deterministic)."""
    x1 = x1.astype(jnp.float32)
    x2 = x2.astype(jnp.float32)
    eps = eps.astype(jnp.float32)

    B = x1.shape[0]
    f1 = x1.shape[1]
    feature_dim = params["w_enc"].shape[0]
    ls = params["w_mean"].shape[1]

    # Fold the activation concat into a (cheap, constant-sized) weight split.
    w_enc1 = params["w_enc"][:f1]
    w_enc2 = params["w_enc"][f1:]
    # Fuse the two latent heads into one matmul.
    w_heads = jnp.concatenate([params["w_mean"], params["w_std"]], axis=1)
    b_heads = jnp.concatenate([params["b_mean"], params["b_std"]], axis=1)

    total = feature_dim + 3 * ls
    packed_width = ((total + 127) // 128) * 128  # lane-dense output slab

    inputs = (x1, x2, eps,
              w_enc1, w_enc2, params["b_enc"], params["gamma"], params["beta"],
              w_heads, b_heads,
              params["w_dec1"], params["b_dec1"],
              params["w_dec2"], params["b_dec2"])

    # Everything fits comfortably in VMEM at these sizes: no grid, full-array
    # blocks. (A batch grid would also break BatchNorm's full-batch statistics,
    # so the single-block form is the semantically correct one.)
    packed = pl.pallas_call(
        _cncvae_kernel,
        out_shape=jax.ShapeDtypeStruct((B, packed_width), jnp.float32),
        in_specs=[pl.BlockSpec(memory_space=pltpu.MemorySpace.VMEM)
                  for _ in inputs],
        out_specs=pl.BlockSpec(memory_space=pltpu.MemorySpace.VMEM),
    )(*inputs)

    out = packed[:, 0:feature_dim]
    z = packed[:, feature_dim:feature_dim + ls]
    mean = packed[:, feature_dim + ls:feature_dim + 2 * ls]
    std = packed[:, feature_dim + 2 * ls:feature_dim + 3 * ls]
    return out, z, mean, std


def init_params(key, feature_dim, ds, ls):
    ks = jax.random.split(key, 10)

    def init(k, shape, scale=0.1):
        return (scale * jax.random.normal(k, shape)).astype(jnp.float32)

    return {
        # nn.Linear(feature_dim, ds) stored pre-transposed: W [in, out], b [1, out]
        "w_enc": init(ks[0], (feature_dim, ds)),
        "b_enc": init(ks[1], (1, ds)),
        # nn.BatchNorm1d(ds): default affine params weight=1, bias=0
        "gamma": jnp.ones((1, ds), jnp.float32),
        "beta": jnp.zeros((1, ds), jnp.float32),
        # nn.Linear(ds, ls) x2
        "w_mean": init(ks[2], (ds, ls)),
        "b_mean": init(ks[3], (1, ls)),
        "w_std": init(ks[4], (ds, ls)),
        "b_std": init(ks[5], (1, ls)),
        # nn.Linear(ls, ds)
        "w_dec1": init(ks[6], (ls, ds)),
        "b_dec1": init(ks[7], (1, ds)),
        # nn.Linear(ds, feature_dim)
        "w_dec2": init(ks[8], (ds, feature_dim)),
        "b_dec2": init(ks[9], (1, feature_dim)),
    }


def _reference_forward(x1, x2, params, eps):
    """Pure-JAX reference (same math) for a correctness spot check."""
    x = jnp.concatenate([x1, x2], axis=-1).astype(jnp.float32)
    h = jnp.maximum(x @ params["w_enc"] + params["b_enc"], 0.0)
    mu = jnp.mean(h, axis=0, keepdims=True)
    var = jnp.mean((h - mu) ** 2, axis=0, keepdims=True)
    h = (h - mu) * jax.lax.rsqrt(var + 1e-5) * params["gamma"] + params["beta"]
    mean = jnp.maximum(h @ params["w_mean"] + params["b_mean"], 0.0)
    std = jnp.maximum(h @ params["w_std"] + params["b_std"], 0.0)
    z = mean + std * eps
    d1 = jnp.maximum(z @ params["w_dec1"] + params["b_dec1"], 0.0)
    out = jnp.maximum(d1 @ params["w_dec2"] + params["b_dec2"], 0.0)
    return out, z, mean, std


if __name__ == "__main__":
    B, feature_dim, ds, ls = 8, 32, 32, 16

    key = jax.random.PRNGKey(0)
    k_params, k_x1, k_x2, k_eps = jax.random.split(key, 4)

    params = init_params(k_params, feature_dim, ds, ls)
    x1 = jax.random.normal(k_x1, (B, feature_dim // 2), jnp.float32)
    x2 = jax.random.normal(k_x2, (B, feature_dim // 2), jnp.float32)
    # TODO(synk): torch.randn_like(s) is stateful/non-deterministic; here the
    # noise is a deterministic kernel input generated with jax.random.
    eps = jax.random.normal(k_eps, (B, ls), jnp.float32)

    fwd = jax.jit(cncvae_forward)
    out, z, mean, std = fwd(x1, x2, params, eps)
    jax.block_until_ready((out, z, mean, std))

    assert out.shape == (B, feature_dim)
    assert z.shape == (B, ls) and mean.shape == (B, ls) and std.shape == (B, ls)

    # Correctness spot check against a pure-JAX reference.
    r_out, r_z, r_mean, r_std = _reference_forward(x1, x2, params, eps)
    for got, want in ((out, r_out), (z, r_z), (mean, r_mean), (std, r_std)):
        assert jnp.allclose(got, want, rtol=2e-3, atol=2e-3)

    print("KERNEL_OK")
</pallas_src>

<mosaic_0001>
module attributes {stable_mosaic.version = 11 : i64} {
  func.func @_cncvae_kernel(%arg0: memref<8x16xf32, #tpu.memory_space<vmem>>, %arg1: memref<8x16xf32, #tpu.memory_space<vmem>>, %arg2: memref<8x16xf32, #tpu.memory_space<vmem>>, %arg3: memref<16x32xf32, #tpu.memory_space<vmem>>, %arg4: memref<16x32xf32, #tpu.memory_space<vmem>>, %arg5: memref<1x32xf32, #tpu.memory_space<vmem>>, %arg6: memref<1x32xf32, #tpu.memory_space<vmem>>, %arg7: memref<1x32xf32, #tpu.memory_space<vmem>>, %arg8: memref<32x32xf32, #tpu.memory_space<vmem>>, %arg9: memref<1x32xf32, #tpu.memory_space<vmem>>, %arg10: memref<16x32xf32, #tpu.memory_space<vmem>>, %arg11: memref<1x32xf32, #tpu.memory_space<vmem>>, %arg12: memref<32x32xf32, #tpu.memory_space<vmem>>, %arg13: memref<1x32xf32, #tpu.memory_space<vmem>>, %arg14: memref<8x128xf32, #tpu.memory_space<vmem>>) attributes {dimension_semantics = [], scalar_prefetch = 0 : i64, scratch_operands = 0 : i64, tpu.core_type = #tpu.core_type<tc>} {
    %c0 = arith.constant 0 : index
    %c0_0 = arith.constant 0 : index
    %0 = vector.load %arg0[%c0, %c0_0] : memref<8x16xf32, #tpu.memory_space<vmem>>, vector<8x16xf32>
    %c0_1 = arith.constant 0 : index
    %c0_2 = arith.constant 0 : index
    %1 = vector.load %arg3[%c0_1, %c0_2] : memref<16x32xf32, #tpu.memory_space<vmem>>, vector<16x32xf32>
    %cst = arith.constant dense<0.000000e+00> : vector<8x32xf32>
    %2 = tpu.matmul %0, %1, %cst {dimension_numbers = #tpu.dot_dimension_numbers<[1], [0], [0], [1], [0, 0, 1, 1], [], []>} : vector<8x16xf32>, vector<16x32xf32>, vector<8x32xf32> -> vector<8x32xf32>
    %c0_3 = arith.constant 0 : index
    %c0_4 = arith.constant 0 : index
    %3 = vector.load %arg1[%c0_3, %c0_4] : memref<8x16xf32, #tpu.memory_space<vmem>>, vector<8x16xf32>
    %c0_5 = arith.constant 0 : index
    %c0_6 = arith.constant 0 : index
    %4 = vector.load %arg4[%c0_5, %c0_6] : memref<16x32xf32, #tpu.memory_space<vmem>>, vector<16x32xf32>
    %cst_7 = arith.constant dense<0.000000e+00> : vector<8x32xf32>
    %5 = tpu.matmul %3, %4, %cst_7 {dimension_numbers = #tpu.dot_dimension_numbers<[1], [0], [0], [1], [0, 0, 1, 1], [], []>} : vector<8x16xf32>, vector<16x32xf32>, vector<8x32xf32> -> vector<8x32xf32>
    %6 = arith.addf %2, %5 : vector<8x32xf32>
    %c0_8 = arith.constant 0 : index
    %c0_9 = arith.constant 0 : index
    %7 = vector.load %arg5[%c0_8, %c0_9] : memref<1x32xf32, #tpu.memory_space<vmem>>, vector<1x32xf32>
    %8 = vector.broadcast %7 : vector<1x32xf32> to vector<8x32xf32>
    %9 = arith.addf %6, %8 : vector<8x32xf32>
    %cst_10 = arith.constant 0.000000e+00 : f32
    %10 = vector.broadcast %cst_10 : f32 to vector<8x32xf32>
    %11 = arith.maximumf %9, %10 : vector<8x32xf32>
    %cst_11 = arith.constant dense<0.000000e+00> : vector<32xf32>
    %12 = vector.multi_reduction <add>, %11, %cst_11 [0] : vector<8x32xf32> to vector<32xf32>
    %13 = vector.shape_cast %12 : vector<32xf32> to vector<1x32xf32>
    %cst_12 = arith.constant 8.000000e+00 : f32
    %14 = vector.broadcast %cst_12 : f32 to vector<1x32xf32>
    %15 = arith.divf %13, %14 : vector<1x32xf32>
    %16 = arith.mulf %11, %11 : vector<8x32xf32>
    %cst_13 = arith.constant dense<0.000000e+00> : vector<32xf32>
    %17 = vector.multi_reduction <add>, %16, %cst_13 [0] : vector<8x32xf32> to vector<32xf32>
    %18 = vector.shape_cast %17 : vector<32xf32> to vector<1x32xf32>
    %cst_14 = arith.constant 8.000000e+00 : f32
    %19 = vector.broadcast %cst_14 : f32 to vector<1x32xf32>
    %20 = arith.divf %18, %19 : vector<1x32xf32>
    %21 = arith.mulf %15, %15 : vector<1x32xf32>
    %22 = arith.subf %20, %21 : vector<1x32xf32>
    %23 = vector.broadcast %15 : vector<1x32xf32> to vector<8x32xf32>
    %24 = arith.subf %11, %23 : vector<8x32xf32>
    %cst_15 = arith.constant 9.99999974E-6 : f32
    %25 = vector.broadcast %cst_15 : f32 to vector<1x32xf32>
    %26 = arith.addf %22, %25 : vector<1x32xf32>
    %27 = math.rsqrt %26 : vector<1x32xf32>
    %28 = vector.broadcast %27 : vector<1x32xf32> to vector<8x32xf32>
    %29 = arith.mulf %24, %28 : vector<8x32xf32>
    %c0_16 = arith.constant 0 : index
    %c0_17 = arith.constant 0 : index
    %30 = vector.load %arg6[%c0_16, %c0_17] : memref<1x32xf32, #tpu.memory_space<vmem>>, vector<1x32xf32>
    %31 = vector.broadcast %30 : vector<1x32xf32> to vector<8x32xf32>
    %32 = arith.mulf %29, %31 : vector<8x32xf32>
    %c0_18 = arith.constant 0 : index
    %c0_19 = arith.constant 0 : index
    %33 = vector.load %arg7[%c0_18, %c0_19] : memref<1x32xf32, #tpu.memory_space<vmem>>, vector<1x32xf32>
    %34 = vector.broadcast %33 : vector<1x32xf32> to vector<8x32xf32>
    %35 = arith.addf %32, %34 : vector<8x32xf32>
    %c0_20 = arith.constant 0 : index
    %c0_21 = arith.constant 0 : index
    %36 = vector.load %arg8[%c0_20, %c0_21] : memref<32x32xf32, #tpu.memory_space<vmem>>, vector<32x32xf32>
    %cst_22 = arith.constant dense<0.000000e+00> : vector<8x32xf32>
    %37 = tpu.matmul %35, %36, %cst_22 {dimension_numbers = #tpu.dot_dimension_numbers<[1], [0], [0], [1], [0, 0, 1, 1], [], []>} : vector<8x32xf32>, vector<32x32xf32>, vector<8x32xf32> -> vector<8x32xf32>
    %c0_23 = arith.constant 0 : index
    %c0_24 = arith.constant 0 : index
    %38 = vector.load %arg9[%c0_23, %c0_24] : memref<1x32xf32, #tpu.memory_space<vmem>>, vector<1x32xf32>
    %39 = vector.broadcast %38 : vector<1x32xf32> to vector<8x32xf32>
    %40 = arith.addf %37, %39 : vector<8x32xf32>
    %cst_25 = arith.constant 0.000000e+00 : f32
    %41 = vector.broadcast %cst_25 : f32 to vector<8x32xf32>
    %42 = arith.maximumf %40, %41 : vector<8x32xf32>
    %43 = vector.extract_strided_slice %42 {offsets = [0, 0], sizes = [8, 16], strides = [1, 1]} : vector<8x32xf32> to vector<8x16xf32>
    %44 = vector.extract_strided_slice %42 {offsets = [0, 16], sizes = [8, 16], strides = [1, 1]} : vector<8x32xf32> to vector<8x16xf32>
    %c0_26 = arith.constant 0 : index
    %c0_27 = arith.constant 0 : index
    %45 = vector.load %arg2[%c0_26, %c0_27] : memref<8x16xf32, #tpu.memory_space<vmem>>, vector<8x16xf32>
    %46 = arith.mulf %44, %45 : vector<8x16xf32>
    %47 = arith.addf %43, %46 : vector<8x16xf32>
    %c0_28 = arith.constant 0 : index
    %c0_29 = arith.constant 0 : index
    %48 = vector.load %arg10[%c0_28, %c0_29] : memref<16x32xf32, #tpu.memory_space<vmem>>, vector<16x32xf32>
    %cst_30 = arith.constant dense<0.000000e+00> : vector<8x32xf32>
    %49 = tpu.matmul %47, %48, %cst_30 {dimension_numbers = #tpu.dot_dimension_numbers<[1], [0], [0], [1], [0, 0, 1, 1], [], []>} : vector<8x16xf32>, vector<16x32xf32>, vector<8x32xf32> -> vector<8x32xf32>
    %c0_31 = arith.constant 0 : index
    %c0_32 = arith.constant 0 : index
    %50 = vector.load %arg11[%c0_31, %c0_32] : memref<1x32xf32, #tpu.memory_space<vmem>>, vector<1x32xf32>
    %51 = vector.broadcast %50 : vector<1x32xf32> to vector<8x32xf32>
    %52 = arith.addf %49, %51 : vector<8x32xf32>
    %cst_33 = arith.constant 0.000000e+00 : f32
    %53 = vector.broadcast %cst_33 : f32 to vector<8x32xf32>
    %54 = arith.maximumf %52, %53 : vector<8x32xf32>
    %c0_34 = arith.constant 0 : index
    %c0_35 = arith.constant 0 : index
    %55 = vector.load %arg12[%c0_34, %c0_35] : memref<32x32xf32, #tpu.memory_space<vmem>>, vector<32x32xf32>
    %cst_36 = arith.constant dense<0.000000e+00> : vector<8x32xf32>
    %56 = tpu.matmul %54, %55, %cst_36 {dimension_numbers = #tpu.dot_dimension_numbers<[1], [0], [0], [1], [0, 0, 1, 1], [], []>} : vector<8x32xf32>, vector<32x32xf32>, vector<8x32xf32> -> vector<8x32xf32>
    %c0_37 = arith.constant 0 : index
    %c0_38 = arith.constant 0 : index
    %57 = vector.load %arg13[%c0_37, %c0_38] : memref<1x32xf32, #tpu.memory_space<vmem>>, vector<1x32xf32>
    %58 = vector.broadcast %57 : vector<1x32xf32> to vector<8x32xf32>
    %59 = arith.addf %56, %58 : vector<8x32xf32>
    %cst_39 = arith.constant 0.000000e+00 : f32
    %60 = vector.broadcast %cst_39 : f32 to vector<8x32xf32>
    %61 = arith.maximumf %59, %60 : vector<8x32xf32>
    %cst_40 = arith.constant 0.000000e+00 : f32
    %62 = vector.broadcast %cst_40 : f32 to vector<8x128xf32>
    %c0_41 = arith.constant 0 : index
    %c0_42 = arith.constant 0 : index
    %63 = vector.load %arg14[%c0_41, %c0_42] : memref<8x128xf32, #tpu.memory_space<vmem>>, vector<8x128xf32>
    tpu.vector_store %arg14[%c0_41, %c0_42], %62 {strides = array<i32>} : memref<8x128xf32, #tpu.memory_space<vmem>>, vector<8x128xf32>,
    %c0_43 = arith.constant 0 : index
    %c0_44 = arith.constant 0 : index
    %64 = vector.load %arg14[%c0_43, %c0_44] : memref<8x128xf32, #tpu.memory_space<vmem>>, vector<8x32xf32>
    tpu.vector_store %arg14[%c0_43, %c0_44], %61 {strides = array<i32>} : memref<8x128xf32, #tpu.memory_space<vmem>>, vector<8x32xf32>,
    %c0_45 = arith.constant 0 : index
    %c32 = arith.constant 32 : index
    %65 = vector.load %arg14[%c0_45, %c32] : memref<8x128xf32, #tpu.memory_space<vmem>>, vector<8x16xf32>
    tpu.vector_store %arg14[%c0_45, %c32], %47 {strides = array<i32>} : memref<8x128xf32, #tpu.memory_space<vmem>>, vector<8x16xf32>,
    %c0_46 = arith.constant 0 : index
    %c48 = arith.constant 48 : index
    %66 = vector.load %arg14[%c0_46, %c48] : memref<8x128xf32, #tpu.memory_space<vmem>>, vector<8x16xf32>
    tpu.vector_store %arg14[%c0_46, %c48], %43 {strides = array<i32>} : memref<8x128xf32, #tpu.memory_space<vmem>>, vector<8x16xf32>,
    %c0_47 = arith.constant 0 : index
    %c64 = arith.constant 64 : index
    %67 = vector.load %arg14[%c0_47, %c64] : memref<8x128xf32, #tpu.memory_space<vmem>>, vector<8x16xf32>
    tpu.vector_store %arg14[%c0_47, %c64], %44 {strides = array<i32>} : memref<8x128xf32, #tpu.memory_space<vmem>>, vector<8x16xf32>,
    return
  }
}

</mosaic_0001>

<llo_original>
// kernel: cncvae_forward.1
$region0: #{cncvae_forward.1}
  #allocation0 [shape = 'u32[]', space=smem, size = 0x4, offset = 0x4, fixed_abs, tag = 'smem constant byte address 0x4 - core index']
  #allocation1 [shape = 'u32[144,128]{1,0:T(1,128)}', space=vmem, size = 0x12000, scoped, tag = 'internal scratch']
  %s0 = inlined_call_operand.vmem [shape: f32[8,16], index: 0, kind: input, shape index: {}]
  %s1 = inlined_call_operand.vmem [shape: f32[8,16], index: 1, kind: input, shape index: {}]
  %s2 = inlined_call_operand.vmem [shape: f32[8,16], index: 2, kind: input, shape index: {}]
  %s3 = inlined_call_operand.vmem [shape: f32[16,32], index: 3, kind: input, shape index: {}]
  %s4 = inlined_call_operand.vmem [shape: f32[16,32], index: 4, kind: input, shape index: {}]
  %s5 = inlined_call_operand.vmem [shape: f32[1,32], index: 5, kind: input, shape index: {}]
  %s6 = inlined_call_operand.vmem [shape: f32[1,32], index: 6, kind: input, shape index: {}]
  %s7 = inlined_call_operand.vmem [shape: f32[1,32], index: 7, kind: input, shape index: {}]
  %s8 = inlined_call_operand.vmem [shape: f32[32,32], index: 8, kind: input, shape index: {}]
  %s9 = inlined_call_operand.vmem [shape: f32[1,32], index: 9, kind: input, shape index: {}]
  %s10 = inlined_call_operand.vmem [shape: f32[16,32], index: 10, kind: input, shape index: {}]
  %s11 = inlined_call_operand.vmem [shape: f32[1,32], index: 11, kind: input, shape index: {}]
  %s12 = inlined_call_operand.vmem [shape: f32[32,32], index: 12, kind: input, shape index: {}]
  %s13 = inlined_call_operand.vmem [shape: f32[1,32], index: 13, kind: input, shape index: {}]
  %s14 = inlined_call_operand.vmem [shape: f32[8,128], index: 14, kind: output, shape index: {}]
  %s15 = sld [smem:[#allocation0]]
  $region66: #{cncvae_forward.1} parent=0
    _
  %s17 = ssub.s32 1, %s15
  %s18 = scalar_select 0, %s17, %s15
  // Predicated region
  $region2: #{cncvae_forward.1} parent=0 // pred_check
    _
  $region3: #{cncvae_forward.1} parent=0 // pred_check_branch
    %20 = sbr.rel (0) target = $region5
  $region4: #{cncvae_forward.1} parent=0 // pred_region
    _
  $region5: #{cncvae_forward.1} parent=0 // pred_fallthru
    _
  // Predicated region
  $region6: #{cncvae_forward.1} parent=0 // pred_check
    _
  $region7: #{cncvae_forward.1} parent=0 // pred_check_branch
    %22 = sbr.rel (0) target = $region9
  $region8: #{cncvae_forward.1} parent=0 // pred_region
    _
  $region9: #{cncvae_forward.1} parent=0 // pred_fallthru
    _
  // Predicated region
  $region10: #{cncvae_forward.1} parent=0 // pred_check
    _
  $region11: #{cncvae_forward.1} parent=0 // pred_check_branch
    %24 = sbr.rel (0) target = $region13
  $region12: #{cncvae_forward.1} parent=0 // pred_region
    _
  $region13: #{cncvae_forward.1} parent=0 // pred_fallthru
    _
  // Predicated region
  $region14: #{cncvae_forward.1} parent=0 // pred_check
    _
  $region15: #{cncvae_forward.1} parent=0 // pred_check_branch
    %26 = sbr.rel (0) target = $region17
  $region16: #{cncvae_forward.1} parent=0 // pred_region
    _
  $region17: #{cncvae_forward.1} parent=0 // pred_fallthru
    _
  // Predicated region
  $region18: #{cncvae_forward.1} parent=0 // pred_check
    _
  $region19: #{cncvae_forward.1} parent=0 // pred_check_branch
    %28 = sbr.rel (0) target = $region21
  $region20: #{cncvae_forward.1} parent=0 // pred_region
    _
  $region21: #{cncvae_forward.1} parent=0 // pred_fallthru
    _
  // Predicated region
  $region22: #{cncvae_forward.1} parent=0 // pred_check
    _
  $region23: #{cncvae_forward.1} parent=0 // pred_check_branch
    %30 = sbr.rel (0) target = $region25
  $region24: #{cncvae_forward.1} parent=0 // pred_region
    _
  $region25: #{cncvae_forward.1} parent=0 // pred_fallthru
    _
  // Predicated region
  $region26: #{cncvae_forward.1} parent=0 // pred_check
    _
  $region27: #{cncvae_forward.1} parent=0 // pred_check_branch
    %32 = sbr.rel (0) target = $region29
  $region28: #{cncvae_forward.1} parent=0 // pred_region
    _
  $region29: #{cncvae_forward.1} parent=0 // pred_fallthru
    _
  // Predicated region
  $region30: #{cncvae_forward.1} parent=0 // pred_check
    _
  $region31: #{cncvae_forward.1} parent=0 // pred_check_branch
    %34 = sbr.rel (0) target = $region33
  $region32: #{cncvae_forward.1} parent=0 // pred_region
    _
  $region33: #{cncvae_forward.1} parent=0 // pred_fallthru
    _
  // Predicated region
  $region34: #{cncvae_forward.1} parent=0 // pred_check
    _
  $region35: #{cncvae_forward.1} parent=0 // pred_check_branch
    %36 = sbr.rel (0) target = $region37
  $region36: #{cncvae_forward.1} parent=0 // pred_region
    _
  $region37: #{cncvae_forward.1} parent=0 // pred_fallthru
    _
  // Predicated region
  $region38: #{cncvae_forward.1} parent=0 // pred_check
    _
  $region39: #{cncvae_forward.1} parent=0 // pred_check_branch
    %38 = sbr.rel (0) target = $region41
  $region40: #{cncvae_forward.1} parent=0 // pred_region
    _
  $region41: #{cncvae_forward.1} parent=0 // pred_fallthru
    _
  // Predicated region
  $region42: #{cncvae_forward.1} parent=0 // pred_check
    _
  $region43: #{cncvae_forward.1} parent=0 // pred_check_branch
    %40 = sbr.rel (0) target = $region45
  $region44: #{cncvae_forward.1} parent=0 // pred_region
    _
  $region45: #{cncvae_forward.1} parent=0 // pred_fallthru
    _
  // Predicated region
  $region46: #{cncvae_forward.1} parent=0 // pred_check
    _
  $region47: #{cncvae_forward.1} parent=0 // pred_check_branch
    %42 = sbr.rel (0) target = $region49
  $region48: #{cncvae_forward.1} parent=0 // pred_region
    _
  $region49: #{cncvae_forward.1} parent=0 // pred_fallthru
    _
  // Predicated region
  $region50: #{cncvae_forward.1} parent=0 // pred_check
    _
  $region51: #{cncvae_forward.1} parent=0 // pred_check_branch
    %44 = sbr.rel (0) target = $region53
  $region52: #{cncvae_forward.1} parent=0 // pred_region
    _
  $region53: #{cncvae_forward.1} parent=0 // pred_fallthru
    _
  // Predicated region
  $region54: #{cncvae_forward.1} parent=0 // pred_check
    _
  $region55: #{cncvae_forward.1} parent=0 // pred_check_branch
    %46 = sbr.rel (0) target = $region57
  $region56: #{cncvae_forward.1} parent=0 // pred_region
    _
  $region57: #{cncvae_forward.1} parent=0 // pred_fallthru
    _
  %v47 = vld [vmem:[%s0] sm:$0xff]
  %v48 = vld [vmem:[%s3] sm:$0xff]
  %v49 = vld [vmem:[%s3 + $0x8] sm:$0xff]
  %v50 = vld [vmem:[%s1] sm:$0xff]
  %v51 = vld [vmem:[%s4] sm:$0xff]
  %v52 = vld [vmem:[%s4 + $0x8] sm:$0xff]
  %vm53 = vcmask 130048
  %v55 = vsel %vm53, %v50, 0
  %57 = vmatprep.subr.mxu0 0.0
  %58 = vmatpush1.msra.mxu0 %v51
  %59 = vmatprep.subr.mxu0 0.0
  %60 = vmatpush1.msra.mxu0 %v52
  %61 = vmatprep.subr.mxu0 0.0
  %62 = vmatpush1.msra.mxu0 0.0
  %63 = vmatprep.subr.mxu0 0.0
  %64 = vmatpush1.msra.mxu0 0.0
  %65 = vmatprep.subr.mxu0 0.0
  %66 = vmatpush1.msra.mxu0 0.0
  %67 = vmatprep.subr.mxu0 0.0
  %68 = vmatpush1.msra.mxu0 0.0
  %69 = vmatprep.subr.mxu0 0.0
  %70 = vmatpush1.msra.mxu0 0.0
  %71 = vmatprep.subr.mxu0 0.0
  %72 = vmatpush1.msra.mxu0 0.0
  %73 = vmatprep.subr.mxu0 0.0
  %74 = vmatpush1.msra.mxu0 0.0
  %75 = vmatprep.subr.mxu0 0.0
  %76 = vmatpush1.msra.mxu0 0.0
  %77 = vmatprep.subr.mxu0 0.0
  %78 = vmatpush1.msra.mxu0 0.0
  %79 = vmatprep.subr.mxu0 0.0
  %80 = vmatpush1.msra.mxu0 0.0
  %81 = vmatprep.subr.mxu0 0.0
  %82 = vmatpush1.msra.mxu0 0.0
  %83 = vmatprep.subr.mxu0 0.0
  %84 = vmatpush1.msra.mxu0 0.0
  %85 = vmatprep.subr.mxu0 0.0
  %86 = vmatpush1.msra.mxu0 0.0
  %87 = vmatprep.subr.mxu0 0.0
  %88 = vmatpush1.msra.mxu0 0.0
  %89 = vmatprep.subr.mxu0 0.0
  %90 = vmatpush1.msra.mxu0 0.0
  %91 = vmatprep.subr.mxu0 0.0
  %92 = vmatpush1.msra.mxu0 0.0
  %93 = vmatprep.subr.mxu0 0.0
  %94 = vmatpush1.msra.mxu0 0.0
  %95 = vmatprep.subr.mxu0 0.0
  %96 = vmatpush1.msra.mxu0 0.0
  %97 = vmatprep.subr.mxu0 0.0
  %98 = vmatpush1.msra.mxu0 0.0
  %99 = vmatprep.subr.mxu0 0.0
  %100 = vmatpush1.msra.mxu0 0.0
  %101 = vmatprep.subr.mxu0 0.0
  %102 = vmatpush1.msra.mxu0 0.0
  %103 = vmatprep.subr.mxu0 0.0
  %104 = vmatpush1.msra.mxu0 0.0
  %105 = vmatprep.subr.mxu0 0.0
  %106 = vmatpush1.msra.mxu0 0.0
  %107 = vmatprep.subr.mxu0 0.0
  %108 = vmatpush1.msra.mxu0 0.0
  %109 = vmatprep.subr.mxu0 0.0
  %110 = vmatpush1.msra.mxu0 0.0
  %111 = vmatprep.subr.mxu0 0.0
  %112 = vmatpush1.msra.mxu0 0.0
  %113 = vmatprep.subr.mxu0 0.0
  %114 = vmatpush1.msra.mxu0 0.0
  %115 = vmatprep.subr.mxu0 0.0
  %116 = vmatpush1.msra.mxu0 0.0
  %117 = vmatprep.subr.mxu0 0.0
  %118 = vmatpush1.msra.mxu0 0.0
  %119 = vmatprep.subr.mxu0 0.0
  %120 = vmatpush1.msra.mxu0 0.0
  %121 = vmatprep.mubr.f32.mxu0 0.0
  %122 = vmatmul.mubr.f32.gmra.mrb[0].mxu0 %v55
  %v123 = vpop.f32.mrb[0].mxu0
  %v124 = vadd.f32 0.0, %v123
  %v125 = vpop.f32.mrb[0].mxu0
  %126 = vdwg.mxu0
  %v128 = vsel %vm53, %v47, 0
  %130 = vmatprep.subr.mxu0 0.0
  %131 = vmatpush1.msra.mxu0 %v48
  %132 = vmatprep.subr.mxu0 0.0
  %133 = vmatpush1.msra.mxu0 %v49
  %134 = vmatprep.subr.mxu0 0.0
  %135 = vmatpush1.msra.mxu0 0.0
  %136 = vmatprep.subr.mxu0 0.0
  %137 = vmatpush1.msra.mxu0 0.0
  %138 = vmatprep.subr.mxu0 0.0
  %139 = vmatpush1.msra.mxu0 0.0
  %140 = vmatprep.subr.mxu0 0.0
  %141 = vmatpush1.msra.mxu0 0.0
  %142 = vmatprep.subr.mxu0 0.0
  %143 = vmatpush1.msra.mxu0 0.0
  %144 = vmatprep.subr.mxu0 0.0
  %145 = vmatpush1.msra.mxu0 0.0
  %146 = vmatprep.subr.mxu0 0.0
  %147 = vmatpush1.msra.mxu0 0.0
  %148 = vmatprep.subr.mxu0 0.0
  %149 = vmatpush1.msra.mxu0 0.0
  %150 = vmatprep.subr.mxu0 0.0
  %151 = vmatpush1.msra.mxu0 0.0
  %152 = vmatprep.subr.mxu0 0.0
  %153 = vmatpush1.msra.mxu0 0.0
  %154 = vmatprep.subr.mxu0 0.0
  %155 = vmatpush1.msra.mxu0 0.0
  %156 = vmatprep.subr.mxu0 0.0
  %157 = vmatpush1.msra.mxu0 0.0
  %158 = vmatprep.subr.mxu0 0.0
  %159 = vmatpush1.msra.mxu0 0.0
  %160 = vmatprep.subr.mxu0 0.0
  %161 = vmatpush1.msra.mxu0 0.0
  %162 = vmatprep.subr.mxu0 0.0
  %163 = vmatpush1.msra.mxu0 0.0
  %164 = vmatprep.subr.mxu0 0.0
  %165 = vmatpush1.msra.mxu0 0.0
  %166 = vmatprep.subr.mxu0 0.0
  %167 = vmatpush1.msra.mxu0 0.0
  %168 = vmatprep.subr.mxu0 0.0
  %169 = vmatpush1.msra.mxu0 0.0
  %170 = vmatprep.subr.mxu0 0.0
  %171 = vmatpush1.msra.mxu0 0.0
  %172 = vmatprep.subr.mxu0 0.0
  %173 = vmatpush1.msra.mxu0 0.0
  %174 = vmatprep.subr.mxu0 0.0
  %175 = vmatpush1.msra.mxu0 0.0
  %176 = vmatprep.subr.mxu0 0.0
  %177 = vmatpush1.msra.mxu0 0.0
  %178 = vmatprep.subr.mxu0 0.0
  %179 = vmatpush1.msra.mxu0 0.0
  %180 = vmatprep.subr.mxu0 0.0
  %181 = vmatpush1.msra.mxu0 0.0
  %182 = vmatprep.subr.mxu0 0.0
  %183 = vmatpush1.msra.mxu0 0.0
  %184 = vmatprep.subr.mxu0 0.0
  %185 = vmatpush1.msra.mxu0 0.0
  %186 = vmatprep.subr.mxu0 0.0
  %187 = vmatpush1.msra.mxu0 0.0
  %188 = vmatprep.subr.mxu0 0.0
  %189 = vmatpush1.msra.mxu0 0.0
  %190 = vmatprep.subr.mxu0 0.0
  %191 = vmatpush1.msra.mxu0 0.0
  %192 = vmatprep.subr.mxu0 0.0
  %193 = vmatpush1.msra.mxu0 0.0
  %194 = vmatprep.mubr.f32.mxu0 0.0
  %195 = vmatmul.mubr.f32.gmra.mrb[0].mxu0 %v128
  %v196 = vpop.f32.mrb[0].mxu0
  %v197 = vadd.f32 %v124, %v196
  %v198 = vpop.f32.mrb[0].mxu0
  %199 = vdwg.mxu0
  %v200 = vld [vmem:[%s5] sm:$0x1]
  %v202 = vlaneseq
  %v203 = vshrl.u32 %v202, 7
  %v204 = vsub.s32 0, %v203
  %v205 = vrot.slane %v200, %v204
  %v207 = vadd.f32 %v197, %v205
  %v208 = vmax.f32 %v207, 0.0
  %vm209 = vcmask 261120
  %v210 = vsel %vm209, %v208, 0.0
  %v211 = vrot.slane %v210, 4
  %v212 = vadd.f32 %v210, %v211
  %v213 = vrot.slane %v212, 2
  %v214 = vadd.f32 %v212, %v213
  %v215 = vrot.slane %v214, 1
  %v216 = vadd.f32 %v214, %v215
  %v217 = vrcp.pop 8.0
  %v218 = vmul.f32 %v216, %v217
  %v219 = vmul.f32 %v208, %v208
  %v220 = vsel %vm209, %v219, 0.0
  %v221 = vrot.slane %v220, 4
  %v222 = vadd.f32 %v220, %v221
  %v223 = vrot.slane %v222, 2
  %v224 = vadd.f32 %v222, %v223
  %v225 = vrot.slane %v224, 1
  %v226 = vadd.f32 %v224, %v225
  %v227 = vmul.f32 %v226, %v217
  %v228 = vmul.f32 %v218, %v218
  %v229 = vsub.f32 %v227, %v228
  %v230 = vsub.f32 %v208, %v218
  %v231 = vadd.f32 %v229, 1e-05
  %v232 = vrsqrt.pop %v231
  %v233 = vmul.f32 %v230, %v232
  %v234 = vld [vmem:[%s6] sm:$0x1]
  %v236 = vlaneseq
  %v237 = vshrl.u32 %v236, 7
  %v238 = vsub.s32 0, %v237
  %v239 = vrot.slane %v234, %v238
  %v241 = vmul.f32 %v233, %v239
  %v242 = vld [vmem:[%s7] sm:$0x1]
  %v244 = vlaneseq
  %v245 = vshrl.u32 %v244, 7
  %v246 = vsub.s32 0, %v245
  %v247 = vrot.slane %v242, %v246
  %v249 = vadd.f32 %v241, %v247
  %v250 = vld [vmem:[%s8] sm:$0xff]
  %v251 = vld [vmem:[%s8 + $0x8] sm:$0xff]
  %v252 = vld [vmem:[%s8 + $0x10] sm:$0xff]
  %v253 = vld [vmem:[%s8 + $0x18] sm:$0xff]
  %v254 = vld [vmem:[%s9] sm:$0x1]
  %v256 = vlaneseq
  %v257 = vshrl.u32 %v256, 7
  %v258 = vsub.s32 0, %v257
  %v259 = vrot.slane %v254, %v258
  %v262 = vsel %vm209, %v249, 0
  %264 = vmatprep.subr.mxu0 0.0
  %265 = vmatpush1.msra.mxu0 %v250
  %266 = vmatprep.subr.mxu0 0.0
  %267 = vmatpush1.msra.mxu0 %v251
  %268 = vmatprep.subr.mxu0 0.0
  %269 = vmatpush1.msra.mxu0 %v252
  %270 = vmatprep.subr.mxu0 0.0
  %271 = vmatpush1.msra.mxu0 %v253
  %272 = vmatprep.subr.mxu0 0.0
  %273 = vmatpush1.msra.mxu0 0.0
  %274 = vmatprep.subr.mxu0 0.0
  %275 = vmatpush1.msra.mxu0 0.0
  %276 = vmatprep.subr.mxu0 0.0
  %277 = vmatpush1.msra.mxu0 0.0
  %278 = vmatprep.subr.mxu0 0.0
  %279 = vmatpush1.msra.mxu0 0.0
  %280 = vmatprep.subr.mxu0 0.0
  %281 = vmatpush1.msra.mxu0 0.0
  %282 = vmatprep.subr.mxu0 0.0
  %283 = vmatpush1.msra.mxu0 0.0
  %284 = vmatprep.subr.mxu0 0.0
  %285 = vmatpush1.msra.mxu0 0.0
  %286 = vmatprep.subr.mxu0 0.0
  %287 = vmatpush1.msra.mxu0 0.0
  %288 = vmatprep.subr.mxu0 0.0
  %289 = vmatpush1.msra.mxu0 0.0
  %290 = vmatprep.subr.mxu0 0.0
  %291 = vmatpush1.msra.mxu0 0.0
  %292 = vmatprep.subr.mxu0 0.0
  %293 = vmatpush1.msra.mxu0 0.0
  %294 = vmatprep.subr.mxu0 0.0
  %295 = vmatpush1.msra.mxu0 0.0
  %296 = vmatprep.subr.mxu0 0.0
  %297 = vmatpush1.msra.mxu0 0.0
  %298 = vmatprep.subr.mxu0 0.0
  %299 = vmatpush1.msra.mxu0 0.0
  %300 = vmatprep.subr.mxu0 0.0
  %301 = vmatpush1.msra.mxu0 0.0
  %302 = vmatprep.subr.mxu0 0.0
  %303 = vmatpush1.msra.mxu0 0.0
  %304 = vmatprep.subr.mxu0 0.0
  %305 = vmatpush1.msra.mxu0 0.0
  %306 = vmatprep.subr.mxu0 0.0
  %307 = vmatpush1.msra.mxu0 0.0
  %308 = vmatprep.subr.mxu0 0.0
  %309 = vmatpush1.msra.mxu0 0.0
  %310 = vmatprep.subr.mxu0 0.0
  %311 = vmatpush1.msra.mxu0 0.0
  %312 = vmatprep.subr.mxu0 0.0
  %313 = vmatpush1.msra.mxu0 0.0
  %314 = vmatprep.subr.mxu0 0.0
  %315 = vmatpush1.msra.mxu0 0.0
  %316 = vmatprep.subr.mxu0 0.0
  %317 = vmatpush1.msra.mxu0 0.0
  %318 = vmatprep.subr.mxu0 0.0
  %319 = vmatpush1.msra.mxu0 0.0
  %320 = vmatprep.subr.mxu0 0.0
  %321 = vmatpush1.msra.mxu0 0.0
  %322 = vmatprep.subr.mxu0 0.0
  %323 = vmatpush1.msra.mxu0 0.0
  %324 = vmatprep.subr.mxu0 0.0
  %325 = vmatpush1.msra.mxu0 0.0
  %326 = vmatprep.subr.mxu0 0.0
  %327 = vmatpush1.msra.mxu0 0.0
  %328 = vmatprep.mubr.f32.mxu0 0.0
  %329 = vmatmul.mubr.f32.gmra.mrb[0].mxu0 %v262
  %v330 = vpop.f32.mrb[0].mxu0
  %v331 = vadd.f32 %v259, %v330
  %v332 = vpop.f32.mrb[0].mxu0
  %333 = vdwg.mxu0
  %v334 = vmax.f32 %v331, 0.0
  %v335 = vld [vmem:[%s2] sm:$0xff]
  %337 = vrot.lane.b32.xlu0 %v335, 16
  %v338 = vpop.permute.xlu0 %337
  %v340 = vmul.f32 %v334, %v338
  %342 = vrot.lane.b32.xlu0 %v340, 112
  %v343 = vpop.permute.xlu0 %342
  %v345 = vadd.f32 %v334, %v343
  %v346 = vld [vmem:[%s10] sm:$0xff]
  %v347 = vld [vmem:[%s10 + $0x8] sm:$0xff]
  %v348 = vld [vmem:[%s11] sm:$0x1]
  %v350 = vlaneseq
  %v351 = vshrl.u32 %v350, 7
  %v352 = vsub.s32 0, %v351
  %v353 = vrot.slane %v348, %v352
  %v356 = vsel %vm53, %v345, 0
  %358 = vmatprep.subr.mxu0 0.0
  %359 = vmatpush1.msra.mxu0 %v346
  %360 = vmatprep.subr.mxu0 0.0
  %361 = vmatpush1.msra.mxu0 %v347
  %362 = vmatprep.subr.mxu0 0.0
  %363 = vmatpush1.msra.mxu0 0.0
  %364 = vmatprep.subr.mxu0 0.0
  %365 = vmatpush1.msra.mxu0 0.0
  %366 = vmatprep.subr.mxu0 0.0
  %367 = vmatpush1.msra.mxu0 0.0
  %368 = vmatprep.subr.mxu0 0.0
  %369 = vmatpush1.msra.mxu0 0.0
  %370 = vmatprep.subr.mxu0 0.0
  %371 = vmatpush1.msra.mxu0 0.0
  %372 = vmatprep.subr.mxu0 0.0
  %373 = vmatpush1.msra.mxu0 0.0
  %374 = vmatprep.subr.mxu0 0.0
  %375 = vmatpush1.msra.mxu0 0.0
  %376 = vmatprep.subr.mxu0 0.0
  %377 = vmatpush1.msra.mxu0 0.0
  %378 = vmatprep.subr.mxu0 0.0
  %379 = vmatpush1.msra.mxu0 0.0
  %380 = vmatprep.subr.mxu0 0.0
  %381 = vmatpush1.msra.mxu0 0.0
  %382 = vmatprep.subr.mxu0 0.0
  %383 = vmatpush1.msra.mxu0 0.0
  %384 = vmatprep.subr.mxu0 0.0
  %385 = vmatpush1.msra.mxu0 0.0
  %386 = vmatprep.subr.mxu0 0.0
  %387 = vmatpush1.msra.mxu0 0.0
  %388 = vmatprep.subr.mxu0 0.0
  %389 = vmatpush1.msra.mxu0 0.0
  %390 = vmatprep.subr.mxu0 0.0
  %391 = vmatpush1.msra.mxu0 0.0
  %392 = vmatprep.subr.mxu0 0.0
  %393 = vmatpush1.msra.mxu0 0.0
  %394 = vmatprep.subr.mxu0 0.0
  %395 = vmatpush1.msra.mxu0 0.0
  %396 = vmatprep.subr.mxu0 0.0
  %397 = vmatpush1.msra.mxu0 0.0
  %398 = vmatprep.subr.mxu0 0.0
  %399 = vmatpush1.msra.mxu0 0.0
  %400 = vmatprep.subr.mxu0 0.0
  %401 = vmatpush1.msra.mxu0 0.0
  %402 = vmatprep.subr.mxu0 0.0
  %403 = vmatpush1.msra.mxu0 0.0
  %404 = vmatprep.subr.mxu0 0.0
  %405 = vmatpush1.msra.mxu0 0.0
  %406 = vmatprep.subr.mxu0 0.0
  %407 = vmatpush1.msra.mxu0 0.0
  %408 = vmatprep.subr.mxu0 0.0
  %409 = vmatpush1.msra.mxu0 0.0
  %410 = vmatprep.subr.mxu0 0.0
  %411 = vmatpush1.msra.mxu0 0.0
  %412 = vmatprep.subr.mxu0 0.0
  %413 = vmatpush1.msra.mxu0 0.0
  %414 = vmatprep.subr.mxu0 0.0
  %415 = vmatpush1.msra.mxu0 0.0
  %416 = vmatprep.subr.mxu0 0.0
  %417 = vmatpush1.msra.mxu0 0.0
  %418 = vmatprep.subr.mxu0 0.0
  %419 = vmatpush1.msra.mxu0 0.0
  %420 = vmatprep.subr.mxu0 0.0
  %421 = vmatpush1.msra.mxu0 0.0
  %422 = vmatprep.mubr.f32.mxu0 0.0
  %423 = vmatmul.mubr.f32.gmra.mrb[0].mxu0 %v356
  %v424 = vpop.f32.mrb[0].mxu0
  %v425 = vadd.f32 %v353, %v424
  %v426 = vpop.f32.mrb[0].mxu0
  %427 = vdwg.mxu0
  %v428 = vmax.f32 %v425, 0.0
  %v429 = vld [vmem:[%s12] sm:$0xff]
  %v430 = vld [vmem:[%s12 + $0x8] sm:$0xff]
  %v431 = vld [vmem:[%s12 + $0x10] sm:$0xff]
  %v432 = vld [vmem:[%s12 + $0x18] sm:$0xff]
  %v433 = vld [vmem:[%s13] sm:$0x1]
  %v435 = vlaneseq
  %v436 = vshrl.u32 %v435, 7
  %v437 = vsub.s32 0, %v436
  %v438 = vrot.slane %v433, %v437
  %v441 = vsel %vm209, %v428, 0
  %443 = vmatprep.subr.mxu0 0.0
  %444 = vmatpush1.msra.mxu0 %v429
  %445 = vmatprep.subr.mxu0 0.0
  %446 = vmatpush1.msra.mxu0 %v430
  %447 = vmatprep.subr.mxu0 0.0
  %448 = vmatpush1.msra.mxu0 %v431
  %449 = vmatprep.subr.mxu0 0.0
  %450 = vmatpush1.msra.mxu0 %v432
  %451 = vmatprep.subr.mxu0 0.0
  %452 = vmatpush1.msra.mxu0 0.0
  %453 = vmatprep.subr.mxu0 0.0
  %454 = vmatpush1.msra.mxu0 0.0
  %455 = vmatprep.subr.mxu0 0.0
  %456 = vmatpush1.msra.mxu0 0.0
  %457 = vmatprep.subr.mxu0 0.0
  %458 = vmatpush1.msra.mxu0 0.0
  %459 = vmatprep.subr.mxu0 0.0
  %460 = vmatpush1.msra.mxu0 0.0
  %461 = vmatprep.subr.mxu0 0.0
  %462 = vmatpush1.msra.mxu0 0.0
  %463 = vmatprep.subr.mxu0 0.0
  %464 = vmatpush1.msra.mxu0 0.0
  %465 = vmatprep.subr.mxu0 0.0
  %466 = vmatpush1.msra.mxu0 0.0
  %467 = vmatprep.subr.mxu0 0.0
  %468 = vmatpush1.msra.mxu0 0.0
  %469 = vmatprep.subr.mxu0 0.0
  %470 = vmatpush1.msra.mxu0 0.0
  %471 = vmatprep.subr.mxu0 0.0
  %472 = vmatpush1.msra.mxu0 0.0
  %473 = vmatprep.subr.mxu0 0.0
  %474 = vmatpush1.msra.mxu0 0.0
  %475 = vmatprep.subr.mxu0 0.0
  %476 = vmatpush1.msra.mxu0 0.0
  %477 = vmatprep.subr.mxu0 0.0
  %478 = vmatpush1.msra.mxu0 0.0
  %479 = vmatprep.subr.mxu0 0.0
  %480 = vmatpush1.msra.mxu0 0.0
  %481 = vmatprep.subr.mxu0 0.0
  %482 = vmatpush1.msra.mxu0 0.0
  %483 = vmatprep.subr.mxu0 0.0
  %484 = vmatpush1.msra.mxu0 0.0
  %485 = vmatprep.subr.mxu0 0.0
  %486 = vmatpush1.msra.mxu0 0.0
  %487 = vmatprep.subr.mxu0 0.0
  %488 = vmatpush1.msra.mxu0 0.0
  %489 = vmatprep.subr.mxu0 0.0
  %490 = vmatpush1.msra.mxu0 0.0
  %491 = vmatprep.subr.mxu0 0.0
  %492 = vmatpush1.msra.mxu0 0.0
  %493 = vmatprep.subr.mxu0 0.0
  %494 = vmatpush1.msra.mxu0 0.0
  %495 = vmatprep.subr.mxu0 0.0
  %496 = vmatpush1.msra.mxu0 0.0
  %497 = vmatprep.subr.mxu0 0.0
  %498 = vmatpush1.msra.mxu0 0.0
  %499 = vmatprep.subr.mxu0 0.0
  %500 = vmatpush1.msra.mxu0 0.0
  %501 = vmatprep.subr.mxu0 0.0
  %502 = vmatpush1.msra.mxu0 0.0
  %503 = vmatprep.subr.mxu0 0.0
  %504 = vmatpush1.msra.mxu0 0.0
  %505 = vmatprep.subr.mxu0 0.0
  %506 = vmatpush1.msra.mxu0 0.0
  %507 = vmatprep.mubr.f32.mxu0 0.0
  %508 = vmatmul.mubr.f32.gmra.mrb[0].mxu0 %v441
  %v509 = vpop.f32.mrb[0].mxu0
  %v510 = vadd.f32 %v438, %v509
  %v511 = vpop.f32.mrb[0].mxu0
  %512 = vdwg.mxu0
  %v513 = vmax.f32 %v510, 0.0
  %514 = vst [vmem:[%s14] sm:$0xff] 0.0
  %515 = vst.msk [vmem:[%s14] sm:$0xff] %vm209, %v513
  %516 = vrot.lane.b32.xlu0 %v345, 32
  %v517 = vpop.permute.xlu0 %516
  %vm519 = vcmask 392448
  %520 = vst.msk [vmem:[%s14] sm:$0xff] %vm519, %v517
  %522 = vrot.lane.b32.xlu0 %v334, 48
  %v523 = vpop.permute.xlu0 %522
  %vm525 = vcmask 523648
  %526 = vst.msk [vmem:[%s14] sm:$0xff] %vm525, %v523
  %vm527 = vcmask 654848
  %528 = vst.msk [vmem:[%s14] sm:$0xff] %vm527, %v523
  // Predicated region
  $region58: #{cncvae_forward.1} parent=0 // pred_check
    _
  $region59: #{cncvae_forward.1} parent=0 // pred_check_branch
    %530 = sbr.rel (0) target = $region61
  $region60: #{cncvae_forward.1} parent=0 // pred_region
    _
  $region61: #{cncvae_forward.1} parent=0 // pred_fallthru
    _
  // Predicated region
  $region62: #{cncvae_forward.1} parent=0 // pred_check
    _
  $region63: #{cncvae_forward.1} parent=0 // pred_check_branch
    %532 = sbr.rel (0) target = $region65
  $region64: #{cncvae_forward.1} parent=0 // pred_region
    _
  $region65: #{cncvae_forward.1} parent=0 // pred_fallthru
    _

</llo_original>
